<compile_context>
chip_gen: v7x
topology: tpu7x:2x2x1
jax: 0.10.0
libtpu: 0.0.40
codegen_flags: <defaults>
</compile_context>

<pallas_src>
import functools

import numpy as np
import jax
import jax.numpy as jnp
from jax import lax
from jax.scipy.special import gammaln
from jax.experimental import pallas as pl
from jax.experimental.pallas import tpu as pltpu


# ----------------------------------------------------------------------------
# In-kernel math helpers
# ----------------------------------------------------------------------------
def _softplus(x):
    # Numerically stable softplus: max(x,0) + log1p(exp(-|x|))
    return jnp.maximum(x, 0.0) + jnp.log1p(jnp.exp(-jnp.abs(x)))


def _horner(coefs, x):
    acc = jnp.full_like(x, coefs[0])
    for c in coefs[1:]:
        acc = acc * x + c
    return acc


def _lanczos_rational_coeffs():
    """Collapse the g=7, 9-term Lanczos series into a single rational P/Q.

    c0 + sum_i c_i/(z+i+1)  ==  P(z)/Q(z),  Q(z) = prod_{j=1..8}(z+j).
    Coefficients are computed once in float64 and baked into the kernel as
    compile-time constants (1 reciprocal instead of 8 divides in-kernel).
    # TODO(synk): for very large concentrations `a` the f32 Horner of the
    # degree-8 P/Q loses precision; swap in a lower-g minimax fit if the model
    # is used far outside softplus(small-MLP-output) range.
    """
    c0 = 0.99999999999980993
    coefs = np.array([676.5203681218851, -1259.1392167224028,
                      771.32342877765313, -176.61502916214059,
                      12.507343278686905, -0.13857109526572012,
                      9.9843695780195716e-6, 1.5056327351493116e-7],
                     dtype=np.float64)
    roots = -np.arange(1.0, 9.0)          # poles at z = -1 .. -8
    q = np.poly(roots)                    # degree 8, highest-order first
    p = c0 * q
    for i in range(8):
        p = p + coefs[i] * np.concatenate([[0.0], np.poly(np.delete(roots, i))])
    return p, q


def _lgamma_pos(a, p_coef, q_coef):
    # Lanczos lgamma for a > 0 (a = softplus(...) so no reflection needed).
    zm1 = a - 1.0
    t = zm1 + 7.5
    rat = _horner(p_coef, zm1) * pl.reciprocal(_horner(q_coef, zm1), approx=True)
    # 0.918938... = 0.5 * log(2*pi)
    return 0.91893853320467274 + (zm1 + 0.5) * jnp.log(t) - t + jnp.log(rat)


# ----------------------------------------------------------------------------
# Kernel
# ----------------------------------------------------------------------------
def gamma_nll_kernel(w_ref, x_ref, w1_ref, b1_ref, w2_ref, b2_ref,
                     w3_ref, b3_ref, out_ref, *, x_dim, p_coef, q_coef):
    # All GEMMs keep the row/tile dimension TM on the lane axis (last dim).
    dot_nt = functools.partial(        # (A, C) x (B, C) -> (A, B)
        lax.dot_general, dimension_numbers=(((1,), (1,)), ((), ())),
        preferred_element_type=jnp.float32)
    dot_nn = functools.partial(        # (A, C) x (C, B) -> (A, B)
        lax.dot_general, dimension_numbers=(((1,), (0,)), ((), ())),
        preferred_element_type=jnp.float32)

    # Fused block-diagonal MLP, transposed: activations are (width, TM).
    h = jnp.tanh(dot_nt(w1_ref[...], w_ref[...]) + b1_ref[...])   # (2n, TM)
    h = jnp.tanh(dot_nn(w2_ref[...], h) + b2_ref[...])            # (128, TM)
    z = dot_nn(w3_ref[...], h) + b3_ref[...]                      # (2*x_dim, TM)

    z_rate = z[:x_dim, :]        # l3_rate output (pre-softplus)
    z_a = z[x_dim:, :]           # l3_a   output (pre-softplus)

    sp = _softplus(z_rate)       # rate = 1 / sp
    a = _softplus(z_a)           # concentration

    x = x_ref[...]               # (x_dim, TM), lane-dense
    log_x = jnp.log(x)
    # Gamma(a, rate).log_prob(x) with rate = 1/sp:
    #   a*log(rate) = -a*log(sp);  rate*x = x * approx_recip(sp)
    #   loss = -log_prob = lgamma(a) + x/sp + log(x) - a*(log(x) - log(sp))
    losses = (_lgamma_pos(a, p_coef, q_coef)
              + x * pl.reciprocal(sp, approx=True)
              + log_x
              - a * (log_x - jnp.log(sp)))                        # (x_dim, TM)

    # Per-row mean = sublane reduce over x_dim -> lane-dense (1, TM) store.
    out_ref[...] = jnp.sum(losses, axis=0, keepdims=True) * (1.0 / x_dim)


# ----------------------------------------------------------------------------
# Parameter fusion (transposed block-diagonal weights; column gather folded
# into the first-layer weight so the kernel consumes un-gathered `w`).
# ----------------------------------------------------------------------------
def fuse_params(params, num_freqs):
    total = sum(num_freqs)
    idx_rate = np.concatenate([np.arange(num_freqs[0]),
                               total + np.arange(num_freqs[0])])
    idx_a = np.concatenate([num_freqs[0] + np.arange(num_freqs[1]),
                            total + num_freqs[0] + np.arange(num_freqs[1])])

    w1r = np.asarray(params["w1r"]); w1a = np.asarray(params["w1a"])
    w2r = np.asarray(params["w2r"]); w2a = np.asarray(params["w2a"])
    w3r = np.asarray(params["w3r"]); w3a = np.asarray(params["w3a"])

    k_in = 2 * total
    n_r, n_a = w1r.shape[1], w1a.shape[1]
    m_r, m_a = w2r.shape[1], w2a.shape[1]
    d_r, d_a = w3r.shape[1], w3a.shape[1]

    # Weights stored transposed (output dim on sublanes): the kernel computes
    # W^T @ act so the row/tile dim TM stays on lanes throughout.
    W1t = np.zeros((n_r + n_a, k_in), np.float32)
    W1t[:n_r, idx_rate] = w1r.T
    W1t[n_r:, idx_a] = w1a.T
    b1 = np.concatenate([np.asarray(params["b1r"]), np.asarray(params["b1a"])])

    W2t = np.zeros((m_r + m_a, n_r + n_a), np.float32)
    W2t[:m_r, :n_r] = w2r.T
    W2t[m_r:, n_r:] = w2a.T
    b2 = np.concatenate([np.asarray(params["b2r"]), np.asarray(params["b2a"])])

    W3t = np.zeros((d_r + d_a, m_r + m_a), np.float32)
    W3t[:d_r, :m_r] = w3r.T
    W3t[d_r:, m_r:] = w3a.T
    b3 = np.concatenate([np.asarray(params["b3r"]), np.asarray(params["b3a"])])

    asj = lambda v: jnp.asarray(v, dtype=jnp.float32)
    return dict(w1=asj(W1t), b1=asj(b1.reshape(-1, 1)),
                w2=asj(W2t), b2=asj(b2.reshape(-1, 1)),
                w3=asj(W3t), b3=asj(b3.reshape(-1, 1)))


# ----------------------------------------------------------------------------
# Forward wrapper
# ----------------------------------------------------------------------------
def _round_up(x, m):
    return -(-x // m) * m


def _choose_tm(M, tm_max=2048):
    """Row-tile size: clamp to round_up(M, 128) so small problems don't pad to
    a full tile; split in two when that costs no extra padding so the 1-D
    'parallel' grid has >= 2 steps for v7x's two TensorCores."""
    m128 = _round_up(M, 128)
    tm = min(tm_max, m128)
    if tm == m128 and m128 >= 256 and (m128 // 2) % 128 == 0:
        tm = m128 // 2
    return tm


def gamma_nll_forward(w, data, fused, *, tm=None):
    """Equivalent of GammaNLL.forward(w, data)."""
    lead_shape = w.shape[:-1]
    M = int(np.prod(lead_shape)) if lead_shape else 1
    K = w.shape[-1]
    x_dim = data.shape[-1]
    n2 = fused["w1"].shape[0]     # fused hidden-1 width (2n)
    h2 = fused["w2"].shape[0]     # fused hidden-2 width (128)
    d2 = fused["w3"].shape[0]     # 2 * x_dim

    if tm is None:
        tm = _choose_tm(M)
    assert tm % 128 == 0, "tm must be a multiple of 128 (lane-dense blocks)"
    m_pad = _round_up(M, tm)

    # w stays row-major (the first GEMM contracts its trailing K axis);
    # data is transposed once so x_dim sits on sublanes, rows on lanes.
    w2d = jnp.asarray(w, jnp.float32).reshape(M, K)
    x2d = jnp.asarray(data, jnp.float32).reshape(M, x_dim).T   # (x_dim, M)
    if m_pad != M:
        w2d = jnp.pad(w2d, ((0, m_pad - M), (0, 0)))
        # Padded columns must stay > 0 so log(x) on discarded lanes is finite.
        x2d = jnp.pad(x2d, ((0, 0), (0, m_pad - M)), constant_values=1.0)

    p_coef, q_coef = _lanczos_rational_coeffs()
    kernel = functools.partial(
        gamma_nll_kernel, x_dim=x_dim,
        p_coef=tuple(float(c) for c in p_coef),
        q_coef=tuple(float(c) for c in q_coef))

    row_blk = lambda i: (i, 0)        # streamed (tm, K) w tiles
    col_blk = lambda i: (0, i)        # streamed (x_dim, tm) / (1, tm) tiles
    resident = lambda i: (0, 0)       # weights stay VMEM-resident

    flops = 2 * m_pad * (K * n2 + n2 * h2 + h2 * d2 + d2)
    transcendentals = m_pad * (n2 + h2 + 10 * x_dim)
    bytes_accessed = 4 * (m_pad * (K + x_dim + 1)
                          + n2 * K + h2 * n2 + d2 * h2 + n2 + h2 + d2)

    out = pl.pallas_call(
        kernel,
        out_shape=jax.ShapeDtypeStruct((1, m_pad), jnp.float32),
        grid=(m_pad // tm,),
        in_specs=[
            pl.BlockSpec((tm, K), row_blk),
            pl.BlockSpec((x_dim, tm), col_blk),
            pl.BlockSpec(fused["w1"].shape, resident),
            pl.BlockSpec(fused["b1"].shape, resident),
            pl.BlockSpec(fused["w2"].shape, resident),
            pl.BlockSpec(fused["b2"].shape, resident),
            pl.BlockSpec(fused["w3"].shape, resident),
            pl.BlockSpec(fused["b3"].shape, resident),
        ],
        out_specs=pl.BlockSpec((1, tm), col_blk),
        compiler_params=pltpu.CompilerParams(
            dimension_semantics=("parallel",)),
        cost_estimate=pl.CostEstimate(
            flops=int(flops), transcendentals=int(transcendentals),
            bytes_accessed=int(bytes_accessed)),
    )(w2d, x2d, fused["w1"], fused["b1"], fused["w2"], fused["b2"],
      fused["w3"], fused["b3"])

    return out[0, :M].reshape(lead_shape)


# ----------------------------------------------------------------------------
# Parameter init (PyTorch-Linear-style) and pure-JAX reference
# ----------------------------------------------------------------------------
def init_params(key, num_freqs, n, x_dim):
    keys = jax.random.split(key, 12)

    def lin(kw, kb, fan_in, fan_out):
        bound = 1.0 / np.sqrt(fan_in)
        W = jax.random.uniform(kw, (fan_in, fan_out), jnp.float32, -bound, bound)
        b = jax.random.uniform(kb, (fan_out,), jnp.float32, -bound, bound)
        return W, b

    w1r, b1r = lin(keys[0], keys[1], 2 * num_freqs[0], n)
    w2r, b2r = lin(keys[2], keys[3], n, 64)
    w3r, b3r = lin(keys[4], keys[5], 64, x_dim)
    w1a, b1a = lin(keys[6], keys[7], 2 * num_freqs[1], n)
    w2a, b2a = lin(keys[8], keys[9], n, 64)
    w3a, b3a = lin(keys[10], keys[11], 64, x_dim)
    return dict(w1r=w1r, b1r=b1r, w2r=w2r, b2r=b2r, w3r=w3r, b3r=b3r,
                w1a=w1a, b1a=b1a, w2a=w2a, b2a=b2a, w3a=w3a, b3a=b3a)


def gamma_nll_reference(w, data, params, num_freqs):
    total = sum(num_freqs)
    idx0 = np.concatenate([np.arange(num_freqs[0]),
                           total + np.arange(num_freqs[0])])
    idx1 = np.concatenate([num_freqs[0] + np.arange(num_freqs[1]),
                           total + num_freqs[0] + np.arange(num_freqs[1])])
    wr = w[..., idx0]
    wa = w[..., idx1]
    h = jnp.tanh(wr @ params["w1r"] + params["b1r"])
    h = jnp.tanh(h @ params["w2r"] + params["b2r"])
    rate = 1.0 / jax.nn.softplus(h @ params["w3r"] + params["b3r"])
    g = jnp.tanh(wa @ params["w1a"] + params["b1a"])
    g = jnp.tanh(g @ params["w2a"] + params["b2a"])
    a = jax.nn.softplus(g @ params["w3a"] + params["b3a"])
    log_prob = (a * jnp.log(rate) + (a - 1.0) * jnp.log(data)
                - rate * data - gammaln(a))
    return jnp.mean(-log_prob, axis=-1)


if __name__ == "__main__":
    # Small shapes consistent with the module:
    #   num_freqs = [num_rate, num_a], w: [T, batch, 2*sum(num_freqs)]
    #   data: [T, batch, x_dim]
    num_freqs = [4, 4]
    n = 32
    x_dim = 16
    T, batch = 8, 2
    total = sum(num_freqs)

    key = jax.random.PRNGKey(0)
    k_w, k_d, k_p = jax.random.split(key, 3)
    w = jax.random.normal(k_w, (T, batch, 2 * total), jnp.float32)
    data = jax.random.uniform(k_d, (T, batch, x_dim), jnp.float32,
                              minval=0.1, maxval=2.0)   # Gamma support: x > 0
    params = init_params(k_p, num_freqs, n, x_dim)
    fused = fuse_params(params, num_freqs)

    out = gamma_nll_forward(w, data, fused)
    jax.block_until_ready(out)
    assert out.shape == (T, batch)
    assert bool(jnp.all(jnp.isfinite(out)))

    ref = gamma_nll_reference(w, data, params, num_freqs)
    assert bool(jnp.allclose(out, ref, atol=2e-3, rtol=2e-3)), \
        float(jnp.max(jnp.abs(out - ref)))
    print("KERNEL_OK")
</pallas_src>

<mosaic_0001>
module attributes {stable_mosaic.version = 11 : i64} {
  func.func @gamma_nll_kernel(%arg0: i32, %arg1: memref<128x16xf32, #tpu.memory_space<vmem>>, %arg2: memref<16x128xf32, #tpu.memory_space<vmem>>, %arg3: memref<64x16xf32, #tpu.memory_space<vmem>>, %arg4: memref<64x1xf32, #tpu.memory_space<vmem>>, %arg5: memref<128x64xf32, #tpu.memory_space<vmem>>, %arg6: memref<128x1xf32, #tpu.memory_space<vmem>>, %arg7: memref<32x128xf32, #tpu.memory_space<vmem>>, %arg8: memref<32x1xf32, #tpu.memory_space<vmem>>, %arg9: memref<1x128xf32, #tpu.memory_space<vmem>>) attributes {dimension_semantics = [#tpu.dimension_semantics<parallel>], iteration_bounds = array<i64: 1>, scalar_prefetch = 0 : i64, scratch_operands = 0 : i64, tpu.core_type = #tpu.core_type<tc>, window_params = [{transform_indices = @transform_0, window_bounds = array<i64: 128, 16>}, {transform_indices = @transform_1, window_bounds = array<i64: 16, 128>}, {pipeline_mode = #tpu.pipeline_mode<synchronous>, transform_indices = @transform_2, window_bounds = array<i64: 64, 16>}, {pipeline_mode = #tpu.pipeline_mode<synchronous>, transform_indices = @transform_3, window_bounds = array<i64: 64, 1>}, {pipeline_mode = #tpu.pipeline_mode<synchronous>, transform_indices = @transform_4, window_bounds = array<i64: 128, 64>}, {pipeline_mode = #tpu.pipeline_mode<synchronous>, transform_indices = @transform_5, window_bounds = array<i64: 128, 1>}, {pipeline_mode = #tpu.pipeline_mode<synchronous>, transform_indices = @transform_6, window_bounds = array<i64: 32, 128>}, {pipeline_mode = #tpu.pipeline_mode<synchronous>, transform_indices = @transform_7, window_bounds = array<i64: 32, 1>}, {transform_indices = @transform_8, window_bounds = array<i64: 1, 128>}]} {
    %c0 = arith.constant 0 : index
    %c0_0 = arith.constant 0 : index
    %0 = vector.load %arg3[%c0, %c0_0] : memref<64x16xf32, #tpu.memory_space<vmem>>, vector<64x16xf32>
    %c0_1 = arith.constant 0 : index
    %c0_2 = arith.constant 0 : index
    %1 = vector.load %arg1[%c0_1, %c0_2] : memref<128x16xf32, #tpu.memory_space<vmem>>, vector<128x16xf32>
    %cst = arith.constant dense<0.000000e+00> : vector<64x128xf32>
    %2 = tpu.matmul %0, %1, %cst {dimension_numbers = #tpu.dot_dimension_numbers<[1], [1], [0], [0], [0, 0, 1, 0], [], []>} : vector<64x16xf32>, vector<128x16xf32>, vector<64x128xf32> -> vector<64x128xf32>
    %c0_3 = arith.constant 0 : index
    %c0_4 = arith.constant 0 : index
    %3 = vector.load %arg4[%c0_3, %c0_4] : memref<64x1xf32, #tpu.memory_space<vmem>>, vector<64x1xf32>
    %4 = vector.broadcast %3 : vector<64x1xf32> to vector<64x128xf32>
    %5 = arith.addf %2, %4 : vector<64x128xf32>
    %6 = math.tanh %5 : vector<64x128xf32>
    %c0_5 = arith.constant 0 : index
    %c0_6 = arith.constant 0 : index
    %7 = vector.load %arg5[%c0_5, %c0_6] : memref<128x64xf32, #tpu.memory_space<vmem>>, vector<128x64xf32>
    %cst_7 = arith.constant dense<0.000000e+00> : vector<128x128xf32>
    %8 = tpu.matmul %7, %6, %cst_7 {dimension_numbers = #tpu.dot_dimension_numbers<[1], [0], [0], [1], [0, 0, 1, 1], [], []>} : vector<128x64xf32>, vector<64x128xf32>, vector<128x128xf32> -> vector<128x128xf32>
    %c0_8 = arith.constant 0 : index
    %c0_9 = arith.constant 0 : index
    %9 = vector.load %arg6[%c0_8, %c0_9] : memref<128x1xf32, #tpu.memory_space<vmem>>, vector<128x1xf32>
    %10 = vector.broadcast %9 : vector<128x1xf32> to vector<128x128xf32>
    %11 = arith.addf %8, %10 : vector<128x128xf32>
    %12 = math.tanh %11 : vector<128x128xf32>
    %c0_10 = arith.constant 0 : index
    %c0_11 = arith.constant 0 : index
    %13 = vector.load %arg7[%c0_10, %c0_11] : memref<32x128xf32, #tpu.memory_space<vmem>>, vector<32x128xf32>
    %cst_12 = arith.constant dense<0.000000e+00> : vector<32x128xf32>
    %14 = tpu.matmul %13, %12, %cst_12 {dimension_numbers = #tpu.dot_dimension_numbers<[1], [0], [0], [1], [0, 0, 1, 1], [], []>} : vector<32x128xf32>, vector<128x128xf32>, vector<32x128xf32> -> vector<32x128xf32>
    %c0_13 = arith.constant 0 : index
    %c0_14 = arith.constant 0 : index
    %15 = vector.load %arg8[%c0_13, %c0_14] : memref<32x1xf32, #tpu.memory_space<vmem>>, vector<32x1xf32>
    %16 = vector.broadcast %15 : vector<32x1xf32> to vector<32x128xf32>
    %17 = arith.addf %14, %16 : vector<32x128xf32>
    %18 = vector.extract_strided_slice %17 {offsets = [0, 0], sizes = [16, 128], strides = [1, 1]} : vector<32x128xf32> to vector<16x128xf32>
    %19 = vector.extract_strided_slice %17 {offsets = [16, 0], sizes = [16, 128], strides = [1, 1]} : vector<32x128xf32> to vector<16x128xf32>
    %cst_15 = arith.constant 0.000000e+00 : f32
    %20 = vector.broadcast %cst_15 : f32 to vector<16x128xf32>
    %21 = arith.maximumf %18, %20 : vector<16x128xf32>
    %22 = math.absf %18 : vector<16x128xf32>
    %cst_16 = arith.constant 0.000000e+00 : f32
    %23 = vector.broadcast %cst_16 : f32 to vector<16x128xf32>
    %24 = arith.subf %23, %22 : vector<16x128xf32>
    %25 = math.exp %24 : vector<16x128xf32>
    %26 = math.log1p %25 : vector<16x128xf32>
    %27 = arith.addf %21, %26 : vector<16x128xf32>
    %cst_17 = arith.constant 0.000000e+00 : f32
    %28 = vector.broadcast %cst_17 : f32 to vector<16x128xf32>
    %29 = arith.maximumf %19, %28 : vector<16x128xf32>
    %30 = math.absf %19 : vector<16x128xf32>
    %cst_18 = arith.constant 0.000000e+00 : f32
    %31 = vector.broadcast %cst_18 : f32 to vector<16x128xf32>
    %32 = arith.subf %31, %30 : vector<16x128xf32>
    %33 = math.exp %32 : vector<16x128xf32>
    %34 = math.log1p %33 : vector<16x128xf32>
    %35 = arith.addf %29, %34 : vector<16x128xf32>
    %c0_19 = arith.constant 0 : index
    %c0_20 = arith.constant 0 : index
    %36 = vector.load %arg2[%c0_19, %c0_20] : memref<16x128xf32, #tpu.memory_space<vmem>>, vector<16x128xf32>
    %37 = math.log %36 : vector<16x128xf32>
    %cst_21 = arith.constant 1.000000e+00 : f32
    %38 = vector.broadcast %cst_21 : f32 to vector<16x128xf32>
    %39 = arith.subf %35, %38 : vector<16x128xf32>
    %cst_22 = arith.constant 7.500000e+00 : f32
    %40 = vector.broadcast %cst_22 : f32 to vector<16x128xf32>
    %41 = arith.addf %39, %40 : vector<16x128xf32>
    %cst_23 = arith.constant 1.000000e+00 : f32
    %42 = vector.broadcast %cst_23 : f32 to vector<16x128xf32>
    %43 = arith.mulf %42, %39 : vector<16x128xf32>
    %cst_24 = arith.constant 60.4583321 : f32
    %44 = vector.broadcast %cst_24 : f32 to vector<16x128xf32>
    %45 = arith.addf %43, %44 : vector<16x128xf32>
    %46 = arith.mulf %45, %39 : vector<16x128xf32>
    %cst_25 = arith.constant 1599.04248 : f32
    %47 = vector.broadcast %cst_25 : f32 to vector<16x128xf32>
    %48 = arith.addf %46, %47 : vector<16x128xf32>
    %49 = arith.mulf %48, %39 : vector<16x128xf32>
    %cst_26 = arith.constant 24165.5098 : f32
    %50 = vector.broadcast %cst_26 : f32 to vector<16x128xf32>
    %51 = arith.addf %49, %50 : vector<16x128xf32>
    %52 = arith.mulf %51, %39 : vector<16x128xf32>
    %cst_27 = arith.constant 228235.219 : f32
    %53 = vector.broadcast %cst_27 : f32 to vector<16x128xf32>
    %54 = arith.addf %52, %53 : vector<16x128xf32>
    %55 = arith.mulf %54, %39 : vector<16x128xf32>
    %cst_28 = arith.constant 1379496.25 : f32
    %56 = vector.broadcast %cst_28 : f32 to vector<16x128xf32>
    %57 = arith.addf %55, %56 : vector<16x128xf32>
    %58 = arith.mulf %57, %39 : vector<16x128xf32>
    %cst_29 = arith.constant 0x4A9F05EA : f32
    %59 = vector.broadcast %cst_29 : f32 to vector<16x128xf32>
    %60 = arith.addf %58, %59 : vector<16x128xf32>
    %61 = arith.mulf %60, %39 : vector<16x128xf32>
    %cst_30 = arith.constant 0x4B2B9D51 : f32
    %62 = vector.broadcast %cst_30 : f32 to vector<16x128xf32>
    %63 = arith.addf %61, %62 : vector<16x128xf32>
    %64 = arith.mulf %63, %39 : vector<16x128xf32>
    %cst_31 = arith.constant 0x4B220ADA : f32
    %65 = vector.broadcast %cst_31 : f32 to vector<16x128xf32>
    %66 = arith.addf %64, %65 : vector<16x128xf32>
    %cst_32 = arith.constant 1.000000e+00 : f32
    %67 = vector.broadcast %cst_32 : f32 to vector<16x128xf32>
    %68 = arith.mulf %67, %39 : vector<16x128xf32>
    %cst_33 = arith.constant 3.600000e+01 : f32
    %69 = vector.broadcast %cst_33 : f32 to vector<16x128xf32>
    %70 = arith.addf %68, %69 : vector<16x128xf32>
    %71 = arith.mulf %70, %39 : vector<16x128xf32>
    %cst_34 = arith.constant 5.460000e+02 : f32
    %72 = vector.broadcast %cst_34 : f32 to vector<16x128xf32>
    %73 = arith.addf %71, %72 : vector<16x128xf32>
    %74 = arith.mulf %73, %39 : vector<16x128xf32>
    %cst_35 = arith.constant 4.536000e+03 : f32
    %75 = vector.broadcast %cst_35 : f32 to vector<16x128xf32>
    %76 = arith.addf %74, %75 : vector<16x128xf32>
    %77 = arith.mulf %76, %39 : vector<16x128xf32>
    %cst_36 = arith.constant 2.244900e+04 : f32
    %78 = vector.broadcast %cst_36 : f32 to vector<16x128xf32>
    %79 = arith.addf %77, %78 : vector<16x128xf32>
    %80 = arith.mulf %79, %39 : vector<16x128xf32>
    %cst_37 = arith.constant 6.728400e+04 : f32
    %81 = vector.broadcast %cst_37 : f32 to vector<16x128xf32>
    %82 = arith.addf %80, %81 : vector<16x128xf32>
    %83 = arith.mulf %82, %39 : vector<16x128xf32>
    %cst_38 = arith.constant 1.181240e+05 : f32
    %84 = vector.broadcast %cst_38 : f32 to vector<16x128xf32>
    %85 = arith.addf %83, %84 : vector<16x128xf32>
    %86 = arith.mulf %85, %39 : vector<16x128xf32>
    %cst_39 = arith.constant 1.095840e+05 : f32
    %87 = vector.broadcast %cst_39 : f32 to vector<16x128xf32>
    %88 = arith.addf %86, %87 : vector<16x128xf32>
    %89 = arith.mulf %88, %39 : vector<16x128xf32>
    %cst_40 = arith.constant 4.032000e+04 : f32
    %90 = vector.broadcast %cst_40 : f32 to vector<16x128xf32>
    %91 = arith.addf %89, %90 : vector<16x128xf32>
    %92 = tpu.reciprocal %91 {approx = true} : vector<16x128xf32> -> vector<16x128xf32>
    %93 = arith.mulf %66, %92 : vector<16x128xf32>
    %cst_41 = arith.constant 5.000000e-01 : f32
    %94 = vector.broadcast %cst_41 : f32 to vector<16x128xf32>
    %95 = arith.addf %39, %94 : vector<16x128xf32>
    %96 = math.log %41 : vector<16x128xf32>
    %97 = arith.mulf %95, %96 : vector<16x128xf32>
    %cst_42 = arith.constant 0.918938517 : f32
    %98 = vector.broadcast %cst_42 : f32 to vector<16x128xf32>
    %99 = arith.addf %98, %97 : vector<16x128xf32>
    %100 = arith.subf %99, %41 : vector<16x128xf32>
    %101 = math.log %93 : vector<16x128xf32>
    %102 = arith.addf %100, %101 : vector<16x128xf32>
    %103 = tpu.reciprocal %27 {approx = true} : vector<16x128xf32> -> vector<16x128xf32>
    %104 = arith.mulf %36, %103 : vector<16x128xf32>
    %105 = arith.addf %102, %104 : vector<16x128xf32>
    %106 = arith.addf %105, %37 : vector<16x128xf32>
    %107 = math.log %27 : vector<16x128xf32>
    %108 = arith.subf %37, %107 : vector<16x128xf32>
    %109 = arith.mulf %35, %108 : vector<16x128xf32>
    %110 = arith.subf %106, %109 : vector<16x128xf32>
    %cst_43 = arith.constant dense<0.000000e+00> : vector<128xf32>
    %111 = vector.multi_reduction <add>, %110, %cst_43 [0] : vector<16x128xf32> to vector<128xf32>
    %112 = vector.shape_cast %111 : vector<128xf32> to vector<1x128xf32>
    %cst_44 = arith.constant 6.250000e-02 : f32
    %113 = vector.broadcast %cst_44 : f32 to vector<1x128xf32>
    %114 = arith.mulf %112, %113 : vector<1x128xf32>
    %c0_45 = arith.constant 0 : index
    %c0_46 = arith.constant 0 : index
    %115 = vector.load %arg9[%c0_45, %c0_46] : memref<1x128xf32, #tpu.memory_space<vmem>>, vector<1x128xf32>
    tpu.vector_store %arg9[%c0_45, %c0_46], %114 {strides = array<i32>} : memref<1x128xf32, #tpu.memory_space<vmem>>, vector<1x128xf32>,
    return
  }
  func.func @transform_0(%arg0: i32) -> (i32, i32) {
    %c0_i32 = arith.constant 0 : i32
    %c0_i32_0 = arith.constant 0 : i32
    return %arg0, %c0_i32 : i32, i32
  }
  func.func @transform_1(%arg0: i32) -> (i32, i32) {
    %c0_i32 = arith.constant 0 : i32
    %c0_i32_0 = arith.constant 0 : i32
    return %c0_i32, %arg0 : i32, i32
  }
  func.func @transform_2(%arg0: i32) -> (i32, i32) {
    %c0_i32 = arith.constant 0 : i32
    %c0_i32_0 = arith.constant 0 : i32
    %c0_i32_1 = arith.constant 0 : i32
    return %c0_i32, %c0_i32_0 : i32, i32
  }
  func.func @transform_3(%arg0: i32) -> (i32, i32) {
    %c0_i32 = arith.constant 0 : i32
    %c0_i32_0 = arith.constant 0 : i32
    %c0_i32_1 = arith.constant 0 : i32
    return %c0_i32, %c0_i32_0 : i32, i32
  }
  func.func @transform_4(%arg0: i32) -> (i32, i32) {
    %c0_i32 = arith.constant 0 : i32
    %c0_i32_0 = arith.constant 0 : i32
    %c0_i32_1 = arith.constant 0 : i32
    return %c0_i32, %c0_i32_0 : i32, i32
  }
  func.func @transform_5(%arg0: i32) -> (i32, i32) {
    %c0_i32 = arith.constant 0 : i32
    %c0_i32_0 = arith.constant 0 : i32
    %c0_i32_1 = arith.constant 0 : i32
    return %c0_i32, %c0_i32_0 : i32, i32
  }
  func.func @transform_6(%arg0: i32) -> (i32, i32) {
    %c0_i32 = arith.constant 0 : i32
    %c0_i32_0 = arith.constant 0 : i32
    %c0_i32_1 = arith.constant 0 : i32
    return %c0_i32, %c0_i32_0 : i32, i32
  }
  func.func @transform_7(%arg0: i32) -> (i32, i32) {
    %c0_i32 = arith.constant 0 : i32
    %c0_i32_0 = arith.constant 0 : i32
    %c0_i32_1 = arith.constant 0 : i32
    return %c0_i32, %c0_i32_0 : i32, i32
  }
  func.func @transform_8(%arg0: i32) -> (i32, i32) {
    %c0_i32 = arith.constant 0 : i32
    %c0_i32_0 = arith.constant 0 : i32
    return %c0_i32, %arg0 : i32, i32
  }
}

</mosaic_0001>

<llo_original>
// kernel: tpu_custom_call.1
$region0: #{tpu_custom_call.1}
  #allocation0 [shape = 'u32[]', space=smem, size = 0x4, offset = 0x4, fixed_abs, tag = 'smem constant byte address 0x4 - core index']
  #allocation1 [shape = 'u32[144,128]{1,0:T(1,128)}', space=vmem, size = 0x12000, scoped, tag = 'internal scratch']
  %s0 = inlined_call_operand.vmem [shape: f32[128,16], index: 0, kind: input, shape index: {}]
  %s1 = inlined_call_operand.vmem [shape: f32[16,128], index: 1, kind: input, shape index: {}]
  %s2 = inlined_call_operand.vmem [shape: f32[64,16], index: 2, kind: input, shape index: {}]
  %s3 = inlined_call_operand.vmem [shape: f32[64,1], index: 3, kind: input, shape index: {}]
  %s4 = inlined_call_operand.vmem [shape: f32[128,64], index: 4, kind: input, shape index: {}]
  %s5 = inlined_call_operand.vmem [shape: f32[128,1], index: 5, kind: input, shape index: {}]
  %s6 = inlined_call_operand.vmem [shape: f32[32,128], index: 6, kind: input, shape index: {}]
  %s7 = inlined_call_operand.vmem [shape: f32[32,1], index: 7, kind: input, shape index: {}]
  %s8 = inlined_call_operand.hbm [shape: f32[1,128], index: 8, kind: output, shape index: {}]
  %s9 = sld [smem:[#allocation0]]
  $region42: #{tpu_custom_call.1} parent=0
    _
  %s11 = ssub.s32 1, %s9
  %s12 = scalar_select 0, %s11, %s9
  $region1: #{tpu_custom_call.1} parent=0
    #allocation2 [shape = 'u8[512]{0}', space=vmem, size = 0x400, scoped, tag = 'output window, operand 0, single buffered']
    #allocation3 [shape = 's32[1]{0}', space=sflag, size = 0x4, scoped, tag = 'scoped memory for tpu_custom_call.1']
    %13 = vsyncpa [#allocation3], 0
    // Predicated region
    $region2: #{tpu_custom_call.1} parent=1 // pred_check
      _
    $region3: #{tpu_custom_call.1} parent=1 // pred_check_branch
      %15 = sbr.rel (0) target = $region5
    $region4: #{tpu_custom_call.1} parent=1 // pred_region
      _
    $region5: #{tpu_custom_call.1} parent=1 // pred_fallthru
      _
    // Predicated region
    $region6: #{tpu_custom_call.1} parent=1 // pred_check
      _
    $region7: #{tpu_custom_call.1} parent=1 // pred_check_branch
      %17 = sbr.rel (0) target = $region9
    $region8: #{tpu_custom_call.1} parent=1 // pred_region
      _
    $region9: #{tpu_custom_call.1} parent=1 // pred_fallthru
      _
    // Predicated region
    $region10: #{tpu_custom_call.1} parent=1 // pred_check
      _
    $region11: #{tpu_custom_call.1} parent=1 // pred_check_branch
      %19 = sbr.rel (0) target = $region13
    $region12: #{tpu_custom_call.1} parent=1 // pred_region
      _
    $region13: #{tpu_custom_call.1} parent=1 // pred_fallthru
      _
    // Predicated region
    $region14: #{tpu_custom_call.1} parent=1 // pred_check
      _
    $region15: #{tpu_custom_call.1} parent=1 // pred_check_branch
      %21 = sbr.rel (0) target = $region17
    $region16: #{tpu_custom_call.1} parent=1 // pred_region
      _
    $region17: #{tpu_custom_call.1} parent=1 // pred_fallthru
      _
    // Predicated region
    $region18: #{tpu_custom_call.1} parent=1 // pred_check
      _
    $region19: #{tpu_custom_call.1} parent=1 // pred_check_branch
      %23 = sbr.rel (0) target = $region21
    $region20: #{tpu_custom_call.1} parent=1 // pred_region
      _
    $region21: #{tpu_custom_call.1} parent=1 // pred_fallthru
      _
    // Predicated region
    $region22: #{tpu_custom_call.1} parent=1 // pred_check
      _
    $region23: #{tpu_custom_call.1} parent=1 // pred_check_branch
      %25 = sbr.rel (0) target = $region25
    $region24: #{tpu_custom_call.1} parent=1 // pred_region
      _
    $region25: #{tpu_custom_call.1} parent=1 // pred_fallthru
      _
    // Predicated region
    $region26: #{tpu_custom_call.1} parent=1 // pred_check
      _
    $region27: #{tpu_custom_call.1} parent=1 // pred_check_branch
      %27 = sbr.rel (0) target = $region29
    $region28: #{tpu_custom_call.1} parent=1 // pred_region
      _
    $region29: #{tpu_custom_call.1} parent=1 // pred_fallthru
      _
    // Predicated region
    $region30: #{tpu_custom_call.1} parent=1 // pred_check
      _
    $region31: #{tpu_custom_call.1} parent=1 // pred_check_branch
      %29 = sbr.rel (0) target = $region33
    $region32: #{tpu_custom_call.1} parent=1 // pred_region
      _
    $region33: #{tpu_custom_call.1} parent=1 // pred_fallthru
      _
    %v30 = vld [vmem:[%s2] sm:$0xff]
    %v31 = vld [vmem:[%s2 + $0x8] sm:$0xff]
    %v32 = vld [vmem:[%s2 + $0x10] sm:$0xff]
    %v33 = vld [vmem:[%s2 + $0x18] sm:$0xff]
    %v34 = vld [vmem:[%s2 + $0x20] sm:$0xff]
    %v35 = vld [vmem:[%s2 + $0x28] sm:$0xff]
    %v36 = vld [vmem:[%s2 + $0x30] sm:$0xff]
    %v37 = vld [vmem:[%s2 + $0x38] sm:$0xff]
    %v38 = vld [vmem:[%s0] sm:$0xff]
    %v39 = vld [vmem:[%s0 + $0x8] sm:$0xff]
    %v40 = vld [vmem:[%s0 + $0x10] sm:$0xff]
    %v41 = vld [vmem:[%s0 + $0x18] sm:$0xff]
    %v42 = vld [vmem:[%s0 + $0x20] sm:$0xff]
    %v43 = vld [vmem:[%s0 + $0x28] sm:$0xff]
    %v44 = vld [vmem:[%s0 + $0x30] sm:$0xff]
    %v45 = vld [vmem:[%s0 + $0x38] sm:$0xff]
    %v46 = vld [vmem:[%s0 + $0x40] sm:$0xff]
    %v47 = vld [vmem:[%s0 + $0x48] sm:$0xff]
    %v48 = vld [vmem:[%s0 + $0x50] sm:$0xff]
    %v49 = vld [vmem:[%s0 + $0x58] sm:$0xff]
    %v50 = vld [vmem:[%s0 + $0x60] sm:$0xff]
    %v51 = vld [vmem:[%s0 + $0x68] sm:$0xff]
    %v52 = vld [vmem:[%s0 + $0x70] sm:$0xff]
    %v53 = vld [vmem:[%s0 + $0x78] sm:$0xff]
    %v54 = vld [vmem:[%s3] sm:$0xff]
    %v55 = vld [vmem:[%s3 + $0x8] sm:$0xff]
    %v56 = vld [vmem:[%s3 + $0x10] sm:$0xff]
    %v57 = vld [vmem:[%s3 + $0x18] sm:$0xff]
    %v58 = vld [vmem:[%s3 + $0x20] sm:$0xff]
    %v59 = vld [vmem:[%s3 + $0x28] sm:$0xff]
    %v60 = vld [vmem:[%s3 + $0x30] sm:$0xff]
    %v61 = vld [vmem:[%s3 + $0x38] sm:$0xff]
    %63 = vset.pattern.permute.xlu0 0
    %64 = vperm.xlu0 %63, %v54
    %v65 = vpop.permute.xlu0 %64
    %68 = vset.pattern.permute.xlu0 0
    %69 = vperm.xlu0 %68, %v55
    %v70 = vpop.permute.xlu0 %69
    %73 = vset.pattern.permute.xlu0 0
    %74 = vperm.xlu0 %73, %v56
    %v75 = vpop.permute.xlu0 %74
    %78 = vset.pattern.permute.xlu0 0
    %79 = vperm.xlu0 %78, %v57
    %v80 = vpop.permute.xlu0 %79
    %83 = vset.pattern.permute.xlu0 0
    %84 = vperm.xlu0 %83, %v58
    %v85 = vpop.permute.xlu0 %84
    %88 = vset.pattern.permute.xlu0 0
    %89 = vperm.xlu0 %88, %v59
    %v90 = vpop.permute.xlu0 %89
    %93 = vset.pattern.permute.xlu0 0
    %94 = vperm.xlu0 %93, %v60
    %v95 = vpop.permute.xlu0 %94
    %98 = vset.pattern.permute.xlu0 0
    %99 = vperm.xlu0 %98, %v61
    %v100 = vpop.permute.xlu0 %99
    %vm102 = vcmask 130048
    %v104 = vsel %vm102, %v30, 0
    %v107 = vsel %vm102, %v31, 0
    %v110 = vsel %vm102, %v32, 0
    %v113 = vsel %vm102, %v33, 0
    %v116 = vsel %vm102, %v34, 0
    %v119 = vsel %vm102, %v35, 0
    %v122 = vsel %vm102, %v36, 0
    %v125 = vsel %vm102, %v37, 0
    %v128 = vsel %vm102, %v38, 0
    %v131 = vsel %vm102, %v39, 0
    %v134 = vsel %vm102, %v40, 0
    %v137 = vsel %vm102, %v41, 0
    %v140 = vsel %vm102, %v42, 0
    %v143 = vsel %vm102, %v43, 0
    %v146 = vsel %vm102, %v44, 0
    %v149 = vsel %vm102, %v45, 0
    %v152 = vsel %vm102, %v46, 0
    %v155 = vsel %vm102, %v47, 0
    %v158 = vsel %vm102, %v48, 0
    %v161 = vsel %vm102, %v49, 0
    %v164 = vsel %vm102, %v50, 0
    %v167 = vsel %vm102, %v51, 0
    %v170 = vsel %vm102, %v52, 0
    %v173 = vsel %vm102, %v53, 0
    %175 = vmatprep.subr.mxu0 0.0
    %176 = vmatpush1.xpose.msra.mxu0 %v128
    %177 = vmatprep.subr.mxu0 0.0
    %178 = vmatpush1.xpose.msra.mxu0 %v131
    %179 = vmatprep.subr.mxu0 0.0
    %180 = vmatpush1.xpose.msra.mxu0 %v134
    %181 = vmatprep.subr.mxu0 0.0
    %182 = vmatpush1.xpose.msra.mxu0 %v137
    %183 = vmatprep.subr.mxu0 0.0
    %184 = vmatpush1.xpose.msra.mxu0 %v140
    %185 = vmatprep.subr.mxu0 0.0
    %186 = vmatpush1.xpose.msra.mxu0 %v143
    %187 = vmatprep.subr.mxu0 0.0
    %188 = vmatpush1.xpose.msra.mxu0 %v146
    %189 = vmatprep.subr.mxu0 0.0
    %190 = vmatpush1.xpose.msra.mxu0 %v149
    %191 = vmatprep.subr.mxu0 0.0
    %192 = vmatpush1.xpose.msra.mxu0 %v152
    %193 = vmatprep.subr.mxu0 0.0
    %194 = vmatpush1.xpose.msra.mxu0 %v155
    %195 = vmatprep.subr.mxu0 0.0
    %196 = vmatpush1.xpose.msra.mxu0 %v158
    %197 = vmatprep.subr.mxu0 0.0
    %198 = vmatpush1.xpose.msra.mxu0 %v161
    %199 = vmatprep.subr.mxu0 0.0
    %200 = vmatpush1.xpose.msra.mxu0 %v164
    %201 = vmatprep.subr.mxu0 0.0
    %202 = vmatpush1.xpose.msra.mxu0 %v167
    %203 = vmatprep.subr.mxu0 0.0
    %204 = vmatpush1.xpose.msra.mxu0 %v170
    %205 = vmatprep.subr.mxu0 0.0
    %206 = vmatpush1.xpose.msra.mxu0 %v173
    %207 = vmatprep.subr.mxu0 0.0
    %208 = vmatpush1.xpose.msra.mxu0 0.0
    %209 = vmatprep.subr.mxu0 0.0
    %210 = vmatpush1.xpose.msra.mxu0 0.0
    %211 = vmatprep.subr.mxu0 0.0
    %212 = vmatpush1.xpose.msra.mxu0 0.0
    %213 = vmatprep.subr.mxu0 0.0
    %214 = vmatpush1.xpose.msra.mxu0 0.0
    %215 = vmatprep.subr.mxu0 0.0
    %216 = vmatpush1.xpose.msra.mxu0 0.0
    %217 = vmatprep.subr.mxu0 0.0
    %218 = vmatpush1.xpose.msra.mxu0 0.0
    %219 = vmatprep.subr.mxu0 0.0
    %220 = vmatpush1.xpose.msra.mxu0 0.0
    %221 = vmatprep.subr.mxu0 0.0
    %222 = vmatpush1.xpose.msra.mxu0 0.0
    %223 = vmatprep.subr.mxu0 0.0
    %224 = vmatpush1.xpose.msra.mxu0 0.0
    %225 = vmatprep.subr.mxu0 0.0
    %226 = vmatpush1.xpose.msra.mxu0 0.0
    %227 = vmatprep.subr.mxu0 0.0
    %228 = vmatpush1.xpose.msra.mxu0 0.0
    %229 = vmatprep.subr.mxu0 0.0
    %230 = vmatpush1.xpose.msra.mxu0 0.0
    %231 = vmatprep.subr.mxu0 0.0
    %232 = vmatpush1.xpose.msra.mxu0 0.0
    %233 = vmatprep.subr.mxu0 0.0
    %234 = vmatpush1.xpose.msra.mxu0 0.0
    %235 = vmatprep.subr.mxu0 0.0
    %236 = vmatpush1.xpose.msra.mxu0 0.0
    %237 = vmatprep.subr.mxu0 0.0
    %238 = vmatpush1.xpose.msra.mxu0 0.0
    %239 = vmatprep.mubr.f32.mxu0 0.0
    %240 = vmatmul.mubr.f32.gmra.mrb[0].mxu0 %v104
    %v241 = vpop.f32.mrb[0].mxu0
    %v242 = vadd.f32 %v65, %v241
    %v243 = vpop.f32.mrb[0].mxu0
    %244 = vmatprep.mubr.f32.mxu0 0.0
    %245 = vmatmul.mubr.f32.gmra.mrb[0].mxu0 %v107
    %v246 = vpop.f32.mrb[0].mxu0
    %v247 = vadd.f32 %v70, %v246
    %v248 = vpop.f32.mrb[0].mxu0
    %249 = vmatprep.mubr.f32.mxu0 0.0
    %250 = vmatmul.mubr.f32.gmra.mrb[0].mxu0 %v110
    %v251 = vpop.f32.mrb[0].mxu0
    %v252 = vadd.f32 %v75, %v251
    %v253 = vpop.f32.mrb[0].mxu0
    %254 = vmatprep.mubr.f32.mxu0 0.0
    %255 = vmatmul.mubr.f32.gmra.mrb[0].mxu0 %v113
    %v256 = vpop.f32.mrb[0].mxu0
    %v257 = vadd.f32 %v80, %v256
    %v258 = vpop.f32.mrb[0].mxu0
    %259 = vmatprep.mubr.f32.mxu0 0.0
    %260 = vmatmul.mubr.f32.gmra.mrb[0].mxu0 %v116
    %v261 = vpop.f32.mrb[0].mxu0
    %v262 = vadd.f32 %v85, %v261
    %v263 = vpop.f32.mrb[0].mxu0
    %264 = vmatprep.mubr.f32.mxu0 0.0
    %265 = vmatmul.mubr.f32.gmra.mrb[0].mxu0 %v119
    %v266 = vpop.f32.mrb[0].mxu0
    %v267 = vadd.f32 %v90, %v266
    %v268 = vpop.f32.mrb[0].mxu0
    %269 = vmatprep.mubr.f32.mxu0 0.0
    %270 = vmatmul.mubr.f32.gmra.mrb[0].mxu0 %v122
    %v271 = vpop.f32.mrb[0].mxu0
    %v272 = vadd.f32 %v95, %v271
    %v273 = vpop.f32.mrb[0].mxu0
    %274 = vmatprep.mubr.f32.mxu0 0.0
    %275 = vmatmul.mubr.f32.gmra.mrb[0].mxu0 %v125
    %v276 = vpop.f32.mrb[0].mxu0
    %v277 = vadd.f32 %v100, %v276
    %v278 = vpop.f32.mrb[0].mxu0
    %279 = vdwg.mxu0
    %v280 = vtanh.pop %v242
    %v281 = vtanh.pop %v247
    %v282 = vtanh.pop %v252
    %v283 = vtanh.pop %v257
    %v284 = vtanh.pop %v262
    %v285 = vtanh.pop %v267
    %v286 = vtanh.pop %v272
    %v287 = vtanh.pop %v277
    %v288 = vld [vmem:[%s4] sm:$0xff]
    %v289 = vld [vmem:[%s4 + $0x8] sm:$0xff]
    %v290 = vld [vmem:[%s4 + $0x10] sm:$0xff]
    %v291 = vld [vmem:[%s4 + $0x18] sm:$0xff]
    %v292 = vld [vmem:[%s4 + $0x20] sm:$0xff]
    %v293 = vld [vmem:[%s4 + $0x28] sm:$0xff]
    %v294 = vld [vmem:[%s4 + $0x30] sm:$0xff]
    %v295 = vld [vmem:[%s4 + $0x38] sm:$0xff]
    %v296 = vld [vmem:[%s4 + $0x40] sm:$0xff]
    %v297 = vld [vmem:[%s4 + $0x48] sm:$0xff]
    %v298 = vld [vmem:[%s4 + $0x50] sm:$0xff]
    %v299 = vld [vmem:[%s4 + $0x58] sm:$0xff]
    %v300 = vld [vmem:[%s4 + $0x60] sm:$0xff]
    %v301 = vld [vmem:[%s4 + $0x68] sm:$0xff]
    %v302 = vld [vmem:[%s4 + $0x70] sm:$0xff]
    %v303 = vld [vmem:[%s4 + $0x78] sm:$0xff]
    %v304 = vld [vmem:[%s5] sm:$0xff]
    %v305 = vld [vmem:[%s5 + $0x8] sm:$0xff]
    %v306 = vld [vmem:[%s5 + $0x10] sm:$0xff]
    %v307 = vld [vmem:[%s5 + $0x18] sm:$0xff]
    %v308 = vld [vmem:[%s5 + $0x20] sm:$0xff]
    %v309 = vld [vmem:[%s5 + $0x28] sm:$0xff]
    %v310 = vld [vmem:[%s5 + $0x30] sm:$0xff]
    %v311 = vld [vmem:[%s5 + $0x38] sm:$0xff]
    %v312 = vld [vmem:[%s5 + $0x40] sm:$0xff]
    %v313 = vld [vmem:[%s5 + $0x48] sm:$0xff]
    %v314 = vld [vmem:[%s5 + $0x50] sm:$0xff]
    %v315 = vld [vmem:[%s5 + $0x58] sm:$0xff]
    %v316 = vld [vmem:[%s5 + $0x60] sm:$0xff]
    %v317 = vld [vmem:[%s5 + $0x68] sm:$0xff]
    %v318 = vld [vmem:[%s5 + $0x70] sm:$0xff]
    %v319 = vld [vmem:[%s5 + $0x78] sm:$0xff]
    %321 = vset.pattern.permute.xlu0 0
    %322 = vperm.xlu0 %321, %v304
    %v323 = vpop.permute.xlu0 %322
    %326 = vset.pattern.permute.xlu0 0
    %327 = vperm.xlu0 %326, %v305
    %v328 = vpop.permute.xlu0 %327
    %331 = vset.pattern.permute.xlu0 0
    %332 = vperm.xlu0 %331, %v306
    %v333 = vpop.permute.xlu0 %332
    %336 = vset.pattern.permute.xlu0 0
    %337 = vperm.xlu0 %336, %v307
    %v338 = vpop.permute.xlu0 %337
    %341 = vset.pattern.permute.xlu0 0
    %342 = vperm.xlu0 %341, %v308
    %v343 = vpop.permute.xlu0 %342
    %346 = vset.pattern.permute.xlu0 0
    %347 = vperm.xlu0 %346, %v309
    %v348 = vpop.permute.xlu0 %347
    %351 = vset.pattern.permute.xlu0 0
    %352 = vperm.xlu0 %351, %v310
    %v353 = vpop.permute.xlu0 %352
    %356 = vset.pattern.permute.xlu0 0
    %357 = vperm.xlu0 %356, %v311
    %v358 = vpop.permute.xlu0 %357
    %361 = vset.pattern.permute.xlu0 0
    %362 = vperm.xlu0 %361, %v312
    %v363 = vpop.permute.xlu0 %362
    %366 = vset.pattern.permute.xlu0 0
    %367 = vperm.xlu0 %366, %v313
    %v368 = vpop.permute.xlu0 %367
    %371 = vset.pattern.permute.xlu0 0
    %372 = vperm.xlu0 %371, %v314
    %v373 = vpop.permute.xlu0 %372
    %376 = vset.pattern.permute.xlu0 0
    %377 = vperm.xlu0 %376, %v315
    %v378 = vpop.permute.xlu0 %377
    %381 = vset.pattern.permute.xlu0 0
    %382 = vperm.xlu0 %381, %v316
    %v383 = vpop.permute.xlu0 %382
    %386 = vset.pattern.permute.xlu0 0
    %387 = vperm.xlu0 %386, %v317
    %v388 = vpop.permute.xlu0 %387
    %391 = vset.pattern.permute.xlu0 0
    %392 = vperm.xlu0 %391, %v318
    %v393 = vpop.permute.xlu0 %392
    %396 = vset.pattern.permute.xlu0 0
    %397 = vperm.xlu0 %396, %v319
    %v398 = vpop.permute.xlu0 %397
    %vm400 = vcmask 523264
    %v402 = vsel %vm400, %v288, 0
    %v405 = vsel %vm400, %v289, 0
    %v408 = vsel %vm400, %v290, 0
    %v411 = vsel %vm400, %v291, 0
    %v414 = vsel %vm400, %v292, 0
    %v417 = vsel %vm400, %v293, 0
    %v420 = vsel %vm400, %v294, 0
    %v423 = vsel %vm400, %v295, 0
    %v426 = vsel %vm400, %v296, 0
    %v429 = vsel %vm400, %v297, 0
    %v432 = vsel %vm400, %v298, 0
    %v435 = vsel %vm400, %v299, 0
    %v438 = vsel %vm400, %v300, 0
    %v441 = vsel %vm400, %v301, 0
    %v444 = vsel %vm400, %v302, 0
    %v447 = vsel %vm400, %v303, 0
    %449 = vmatprep.subr.mxu0 0.0
    %450 = vmatpush1.msra.mxu0 %v280
    %451 = vmatprep.subr.mxu0 0.0
    %452 = vmatpush1.msra.mxu0 %v281
    %453 = vmatprep.subr.mxu0 0.0
    %454 = vmatpush1.msra.mxu0 %v282
    %455 = vmatprep.subr.mxu0 0.0
    %456 = vmatpush1.msra.mxu0 %v283
    %457 = vmatprep.subr.mxu0 0.0
    %458 = vmatpush1.msra.mxu0 %v284
    %459 = vmatprep.subr.mxu0 0.0
    %460 = vmatpush1.msra.mxu0 %v285
    %461 = vmatprep.subr.mxu0 0.0
    %462 = vmatpush1.msra.mxu0 %v286
    %463 = vmatprep.subr.mxu0 0.0
    %464 = vmatpush1.msra.mxu0 %v287
    %465 = vmatprep.subr.mxu0 0.0
    %466 = vmatpush1.msra.mxu0 0.0
    %467 = vmatprep.subr.mxu0 0.0
    %468 = vmatpush1.msra.mxu0 0.0
    %469 = vmatprep.subr.mxu0 0.0
    %470 = vmatpush1.msra.mxu0 0.0
    %471 = vmatprep.subr.mxu0 0.0
    %472 = vmatpush1.msra.mxu0 0.0
    %473 = vmatprep.subr.mxu0 0.0
    %474 = vmatpush1.msra.mxu0 0.0
    %475 = vmatprep.subr.mxu0 0.0
    %476 = vmatpush1.msra.mxu0 0.0
    %477 = vmatprep.subr.mxu0 0.0
    %478 = vmatpush1.msra.mxu0 0.0
    %479 = vmatprep.subr.mxu0 0.0
    %480 = vmatpush1.msra.mxu0 0.0
    %481 = vmatprep.subr.mxu0 0.0
    %482 = vmatpush1.msra.mxu0 0.0
    %483 = vmatprep.subr.mxu0 0.0
    %484 = vmatpush1.msra.mxu0 0.0
    %485 = vmatprep.subr.mxu0 0.0
    %486 = vmatpush1.msra.mxu0 0.0
    %487 = vmatprep.subr.mxu0 0.0
    %488 = vmatpush1.msra.mxu0 0.0
    %489 = vmatprep.subr.mxu0 0.0
    %490 = vmatpush1.msra.mxu0 0.0
    %491 = vmatprep.subr.mxu0 0.0
    %492 = vmatpush1.msra.mxu0 0.0
    %493 = vmatprep.subr.mxu0 0.0
    %494 = vmatpush1.msra.mxu0 0.0
    %495 = vmatprep.subr.mxu0 0.0
    %496 = vmatpush1.msra.mxu0 0.0
    %497 = vmatprep.subr.mxu0 0.0
    %498 = vmatpush1.msra.mxu0 0.0
    %499 = vmatprep.subr.mxu0 0.0
    %500 = vmatpush1.msra.mxu0 0.0
    %501 = vmatprep.subr.mxu0 0.0
    %502 = vmatpush1.msra.mxu0 0.0
    %503 = vmatprep.subr.mxu0 0.0
    %504 = vmatpush1.msra.mxu0 0.0
    %505 = vmatprep.subr.mxu0 0.0
    %506 = vmatpush1.msra.mxu0 0.0
    %507 = vmatprep.subr.mxu0 0.0
    %508 = vmatpush1.msra.mxu0 0.0
    %509 = vmatprep.subr.mxu0 0.0
    %510 = vmatpush1.msra.mxu0 0.0
    %511 = vmatprep.subr.mxu0 0.0
    %512 = vmatpush1.msra.mxu0 0.0
    %513 = vmatprep.mubr.f32.mxu0 0.0
    %514 = vmatmul.mubr.f32.gmra.mrb[0].mxu0 %v402
    %v515 = vpop.f32.mrb[0].mxu0
    %v516 = vadd.f32 %v323, %v515
    %v517 = vpop.f32.mrb[0].mxu0
    %518 = vmatprep.mubr.f32.mxu0 0.0
    %519 = vmatmul.mubr.f32.gmra.mrb[0].mxu0 %v405
    %v520 = vpop.f32.mrb[0].mxu0
    %v521 = vadd.f32 %v328, %v520
    %v522 = vpop.f32.mrb[0].mxu0
    %523 = vmatprep.mubr.f32.mxu0 0.0
    %524 = vmatmul.mubr.f32.gmra.mrb[0].mxu0 %v408
    %v525 = vpop.f32.mrb[0].mxu0
    %v526 = vadd.f32 %v333, %v525
    %v527 = vpop.f32.mrb[0].mxu0
    %528 = vmatprep.mubr.f32.mxu0 0.0
    %529 = vmatmul.mubr.f32.gmra.mrb[0].mxu0 %v411
    %v530 = vpop.f32.mrb[0].mxu0
    %v531 = vadd.f32 %v338, %v530
    %v532 = vpop.f32.mrb[0].mxu0
    %533 = vmatprep.mubr.f32.mxu0 0.0
    %534 = vmatmul.mubr.f32.gmra.mrb[0].mxu0 %v414
    %v535 = vpop.f32.mrb[0].mxu0
    %v536 = vadd.f32 %v343, %v535
    %v537 = vpop.f32.mrb[0].mxu0
    %538 = vmatprep.mubr.f32.mxu0 0.0
    %539 = vmatmul.mubr.f32.gmra.mrb[0].mxu0 %v417
    %v540 = vpop.f32.mrb[0].mxu0
    %v541 = vadd.f32 %v348, %v540
    %v542 = vpop.f32.mrb[0].mxu0
    %543 = vmatprep.mubr.f32.mxu0 0.0
    %544 = vmatmul.mubr.f32.gmra.mrb[0].mxu0 %v420
    %v545 = vpop.f32.mrb[0].mxu0
    %v546 = vadd.f32 %v353, %v545
    %v547 = vpop.f32.mrb[0].mxu0
    %548 = vmatprep.mubr.f32.mxu0 0.0
    %549 = vmatmul.mubr.f32.gmra.mrb[0].mxu0 %v423
    %v550 = vpop.f32.mrb[0].mxu0
    %v551 = vadd.f32 %v358, %v550
    %v552 = vpop.f32.mrb[0].mxu0
    %553 = vmatprep.mubr.f32.mxu0 0.0
    %554 = vmatmul.mubr.f32.gmra.mrb[0].mxu0 %v426
    %v555 = vpop.f32.mrb[0].mxu0
    %v556 = vadd.f32 %v363, %v555
    %v557 = vpop.f32.mrb[0].mxu0
    %558 = vmatprep.mubr.f32.mxu0 0.0
    %559 = vmatmul.mubr.f32.gmra.mrb[0].mxu0 %v429
    %v560 = vpop.f32.mrb[0].mxu0
    %v561 = vadd.f32 %v368, %v560
    %v562 = vpop.f32.mrb[0].mxu0
    %563 = vmatprep.mubr.f32.mxu0 0.0
    %564 = vmatmul.mubr.f32.gmra.mrb[0].mxu0 %v432
    %v565 = vpop.f32.mrb[0].mxu0
    %v566 = vadd.f32 %v373, %v565
    %v567 = vpop.f32.mrb[0].mxu0
    %568 = vmatprep.mubr.f32.mxu0 0.0
    %569 = vmatmul.mubr.f32.gmra.mrb[0].mxu0 %v435
    %v570 = vpop.f32.mrb[0].mxu0
    %v571 = vadd.f32 %v378, %v570
    %v572 = vpop.f32.mrb[0].mxu0
    %573 = vmatprep.mubr.f32.mxu0 0.0
    %574 = vmatmul.mubr.f32.gmra.mrb[0].mxu0 %v438
    %v575 = vpop.f32.mrb[0].mxu0
    %v576 = vadd.f32 %v383, %v575
    %v577 = vpop.f32.mrb[0].mxu0
    %578 = vmatprep.mubr.f32.mxu0 0.0
    %579 = vmatmul.mubr.f32.gmra.mrb[0].mxu0 %v441
    %v580 = vpop.f32.mrb[0].mxu0
    %v581 = vadd.f32 %v388, %v580
    %v582 = vpop.f32.mrb[0].mxu0
    %583 = vmatprep.mubr.f32.mxu0 0.0
    %584 = vmatmul.mubr.f32.gmra.mrb[0].mxu0 %v444
    %v585 = vpop.f32.mrb[0].mxu0
    %v586 = vadd.f32 %v393, %v585
    %v587 = vpop.f32.mrb[0].mxu0
    %588 = vmatprep.mubr.f32.mxu0 0.0
    %589 = vmatmul.mubr.f32.gmra.mrb[0].mxu0 %v447
    %v590 = vpop.f32.mrb[0].mxu0
    %v591 = vadd.f32 %v398, %v590
    %v592 = vpop.f32.mrb[0].mxu0
    %593 = vdwg.mxu0
    %v594 = vtanh.pop %v516
    %v595 = vtanh.pop %v521
    %v596 = vtanh.pop %v526
    %v597 = vtanh.pop %v531
    %v598 = vtanh.pop %v536
    %v599 = vtanh.pop %v541
    %v600 = vtanh.pop %v546
    %v601 = vtanh.pop %v551
    %v602 = vtanh.pop %v556
    %v603 = vtanh.pop %v561
    %v604 = vtanh.pop %v566
    %v605 = vtanh.pop %v571
    %v606 = vtanh.pop %v576
    %v607 = vtanh.pop %v581
    %v608 = vtanh.pop %v586
    %v609 = vtanh.pop %v591
    %v610 = vld [vmem:[%s6] sm:$0xff]
    %v611 = vld [vmem:[%s6 + $0x8] sm:$0xff]
    %v612 = vld [vmem:[%s6 + $0x10] sm:$0xff]
    %v613 = vld [vmem:[%s6 + $0x18] sm:$0xff]
    %v614 = vld [vmem:[%s7] sm:$0xff]
    %v615 = vld [vmem:[%s7 + $0x8] sm:$0xff]
    %v616 = vld [vmem:[%s7 + $0x10] sm:$0xff]
    %v617 = vld [vmem:[%s7 + $0x18] sm:$0xff]
    %619 = vset.pattern.permute.xlu0 0
    %620 = vperm.xlu0 %619, %v614
    %v621 = vpop.permute.xlu0 %620
    %624 = vset.pattern.permute.xlu0 0
    %625 = vperm.xlu0 %624, %v615
    %v626 = vpop.permute.xlu0 %625
    %629 = vset.pattern.permute.xlu0 0
    %630 = vperm.xlu0 %629, %v616
    %v631 = vpop.permute.xlu0 %630
    %634 = vset.pattern.permute.xlu0 0
    %635 = vperm.xlu0 %634, %v617
    %v636 = vpop.permute.xlu0 %635
    %638 = vmatprep.subr.mxu0 0.0
    %639 = vmatpush1.msra.mxu0 %v594
    %640 = vmatprep.subr.mxu0 0.0
    %641 = vmatpush1.msra.mxu0 %v595
    %642 = vmatprep.subr.mxu0 0.0
    %643 = vmatpush1.msra.mxu0 %v596
    %644 = vmatprep.subr.mxu0 0.0
    %645 = vmatpush1.msra.mxu0 %v597
    %646 = vmatprep.subr.mxu0 0.0
    %647 = vmatpush1.msra.mxu0 %v598
    %648 = vmatprep.subr.mxu0 0.0
    %649 = vmatpush1.msra.mxu0 %v599
    %650 = vmatprep.subr.mxu0 0.0
    %651 = vmatpush1.msra.mxu0 %v600
    %652 = vmatprep.subr.mxu0 0.0
    %653 = vmatpush1.msra.mxu0 %v601
    %654 = vmatprep.subr.mxu0 0.0
    %655 = vmatpush1.msra.mxu0 %v602
    %656 = vmatprep.subr.mxu0 0.0
    %657 = vmatpush1.msra.mxu0 %v603
    %658 = vmatprep.subr.mxu0 0.0
    %659 = vmatpush1.msra.mxu0 %v604
    %660 = vmatprep.subr.mxu0 0.0
    %661 = vmatpush1.msra.mxu0 %v605
    %662 = vmatprep.subr.mxu0 0.0
    %663 = vmatpush1.msra.mxu0 %v606
    %664 = vmatprep.subr.mxu0 0.0
    %665 = vmatpush1.msra.mxu0 %v607
    %666 = vmatprep.subr.mxu0 0.0
    %667 = vmatpush1.msra.mxu0 %v608
    %668 = vmatprep.subr.mxu0 0.0
    %669 = vmatpush1.msra.mxu0 %v609
    %670 = vmatprep.subr.mxu0 0.0
    %671 = vmatpush1.msra.mxu0 0.0
    %672 = vmatprep.subr.mxu0 0.0
    %673 = vmatpush1.msra.mxu0 0.0
    %674 = vmatprep.subr.mxu0 0.0
    %675 = vmatpush1.msra.mxu0 0.0
    %676 = vmatprep.subr.mxu0 0.0
    %677 = vmatpush1.msra.mxu0 0.0
    %678 = vmatprep.subr.mxu0 0.0
    %679 = vmatpush1.msra.mxu0 0.0
    %680 = vmatprep.subr.mxu0 0.0
    %681 = vmatpush1.msra.mxu0 0.0
    %682 = vmatprep.subr.mxu0 0.0
    %683 = vmatpush1.msra.mxu0 0.0
    %684 = vmatprep.subr.mxu0 0.0
    %685 = vmatpush1.msra.mxu0 0.0
    %686 = vmatprep.subr.mxu0 0.0
    %687 = vmatpush1.msra.mxu0 0.0
    %688 = vmatprep.subr.mxu0 0.0
    %689 = vmatpush1.msra.mxu0 0.0
    %690 = vmatprep.subr.mxu0 0.0
    %691 = vmatpush1.msra.mxu0 0.0
    %692 = vmatprep.subr.mxu0 0.0
    %693 = vmatpush1.msra.mxu0 0.0
    %694 = vmatprep.subr.mxu0 0.0
    %695 = vmatpush1.msra.mxu0 0.0
    %696 = vmatprep.subr.mxu0 0.0
    %697 = vmatpush1.msra.mxu0 0.0
    %698 = vmatprep.subr.mxu0 0.0
    %699 = vmatpush1.msra.mxu0 0.0
    %700 = vmatprep.subr.mxu0 0.0
    %701 = vmatpush1.msra.mxu0 0.0
    %702 = vmatprep.mubr.f32.mxu0 0.0
    %703 = vmatmul.mubr.f32.gmra.mrb[0].mxu0 %v610
    %v704 = vpop.f32.mrb[0].mxu0
    %v705 = vadd.f32 %v621, %v704
    %v706 = vpop.f32.mrb[0].mxu0
    %707 = vmatprep.mubr.f32.mxu0 0.0
    %708 = vmatmul.mubr.f32.gmra.mrb[0].mxu0 %v611
    %v709 = vpop.f32.mrb[0].mxu0
    %v710 = vadd.f32 %v626, %v709
    %v711 = vpop.f32.mrb[0].mxu0
    %712 = vmatprep.mubr.f32.mxu0 0.0
    %713 = vmatmul.mubr.f32.gmra.mrb[0].mxu0 %v612
    %v714 = vpop.f32.mrb[0].mxu0
    %v715 = vadd.f32 %v631, %v714
    %v716 = vpop.f32.mrb[0].mxu0
    %717 = vmatprep.mubr.f32.mxu0 0.0
    %718 = vmatmul.mubr.f32.gmra.mrb[0].mxu0 %v613
    %v719 = vpop.f32.mrb[0].mxu0
    %v720 = vadd.f32 %v636, %v719
    %v721 = vpop.f32.mrb[0].mxu0
    %722 = vdwg.mxu0
    %v723 = vmax.f32 %v705, 0.0
    %v724 = vmax.f32 %v710, 0.0
    %v725 = vand.u32 2147483647, %v705
    %v726 = vand.u32 2147483647, %v710
    %v727 = vsub.f32 0.0, %v725
    %v728 = vsub.f32 0.0, %v726
    %v729 = vmul.f32 %v727, 1.442695
    %v730 = vpow.pop %v729
    %v731 = vmul.f32 %v728, 1.442695
    %v732 = vpow.pop %v731
    %v733 = vadd.f32 %v730, 1.0
    %v734 = vlog2.pop %v733
    %v735 = vmul.f32 %v734, 0.6931472
    %v736 = vmul.f32 -0.5, %v730
    %v737 = vadd.f32 %v736, 1.0
    %v738 = vmul.f32 %v737, %v730
    %v739 = vand.u32 2147483647, %v730
    %vm740 = vcmp.lt.f32.partialorder %v739, 0.0004427343
    %v741 = vsel %vm740, %v738, %v735
    %v742 = vadd.f32 %v732, 1.0
    %v743 = vlog2.pop %v742
    %v744 = vmul.f32 %v743, 0.6931472
    %v745 = vmul.f32 -0.5, %v732
    %v746 = vadd.f32 %v745, 1.0
    %v747 = vmul.f32 %v746, %v732
    %v748 = vand.u32 2147483647, %v732
    %vm749 = vcmp.lt.f32.partialorder %v748, 0.0004427343
    %v750 = vsel %vm749, %v747, %v744
    %v751 = vadd.f32 %v723, %v741
    %v752 = vadd.f32 %v724, %v750
    %v753 = vmax.f32 %v715, 0.0
    %v754 = vmax.f32 %v720, 0.0
    %v755 = vand.u32 2147483647, %v715
    %v756 = vand.u32 2147483647, %v720
    %v757 = vsub.f32 0.0, %v755
    %v758 = vsub.f32 0.0, %v756
    %v759 = vmul.f32 %v757, 1.442695
    %v760 = vpow.pop %v759
    %v761 = vmul.f32 %v758, 1.442695
    %v762 = vpow.pop %v761
    %v763 = vadd.f32 %v760, 1.0
    %v764 = vlog2.pop %v763
    %v765 = vmul.f32 %v764, 0.6931472
    %v766 = vmul.f32 -0.5, %v760
    %v767 = vadd.f32 %v766, 1.0
    %v768 = vmul.f32 %v767, %v760
    %v769 = vand.u32 2147483647, %v760
    %vm770 = vcmp.lt.f32.partialorder %v769, 0.0004427343
    %v771 = vsel %vm770, %v768, %v765
    %v772 = vadd.f32 %v762, 1.0
    %v773 = vlog2.pop %v772
    %v774 = vmul.f32 %v773, 0.6931472
    %v775 = vmul.f32 -0.5, %v762
    %v776 = vadd.f32 %v775, 1.0
    %v777 = vmul.f32 %v776, %v762
    %v778 = vand.u32 2147483647, %v762
    %vm779 = vcmp.lt.f32.partialorder %v778, 0.0004427343
    %v780 = vsel %vm779, %v777, %v774
    %v781 = vadd.f32 %v753, %v771
    %v782 = vadd.f32 %v754, %v780
    %v783 = vld [vmem:[%s1] sm:$0xff]
    %v784 = vld [vmem:[%s1 + $0x8] sm:$0xff]
    %v785 = vlog2.pop %v783
    %v786 = vmul.f32 %v785, 0.6931472
    %v787 = vlog2.pop %v784
    %v788 = vmul.f32 %v787, 0.6931472
    %v789 = vsub.f32 %v781, 1.0
    %v790 = vsub.f32 %v782, 1.0
    %v791 = vadd.f32 %v789, 7.5
    %v792 = vadd.f32 %v790, 7.5
    %v793 = vadd.f32 %v789, 60.458332
    %v794 = vadd.f32 %v790, 60.458332
    %v795 = vmul.f32 %v793, %v789
    %v796 = vmul.f32 %v794, %v790
    %v797 = vadd.f32 %v795, 1599.0425
    %v798 = vadd.f32 %v796, 1599.0425
    %v799 = vmul.f32 %v797, %v789
    %v800 = vmul.f32 %v798, %v790
    %v801 = vadd.f32 %v799, 24165.51
    %v802 = vadd.f32 %v800, 24165.51
    %v803 = vmul.f32 %v801, %v789
    %v804 = vmul.f32 %v802, %v790
    %v805 = vadd.f32 %v803, 228235.22
    %v806 = vadd.f32 %v804, 228235.22
    %v807 = vmul.f32 %v805, %v789
    %v808 = vmul.f32 %v806, %v790
    %v809 = vadd.f32 %v807, 1379496.3
    %v810 = vadd.f32 %v808, 1379496.3
    %v811 = vmul.f32 %v809, %v789
    %v812 = vmul.f32 %v810, %v790
    %v813 = vadd.f32 %v811, 5210869.0
    %v814 = vadd.f32 %v812, 5210869.0
    %v815 = vmul.f32 %v813, %v789
    %v816 = vmul.f32 %v814, %v790
    %v817 = vadd.f32 %v815, 11246929.0
    %v818 = vadd.f32 %v816, 11246929.0
    %v819 = vmul.f32 %v817, %v789
    %v820 = vmul.f32 %v818, %v790
    %v821 = vadd.f32 %v819, 10619610.0
    %v822 = vadd.f32 %v820, 10619610.0
    %v823 = vadd.f32 %v789, 36.0
    %v824 = vadd.f32 %v790, 36.0
    %v825 = vmul.f32 %v823, %v789
    %v826 = vmul.f32 %v824, %v790
    %v827 = vadd.f32 %v825, 546.0
    %v828 = vadd.f32 %v826, 546.0
    %v829 = vmul.f32 %v827, %v789
    %v830 = vmul.f32 %v828, %v790
    %v831 = vadd.f32 %v829, 4536.0
    %v832 = vadd.f32 %v830, 4536.0
    %v833 = vmul.f32 %v831, %v789
    %v834 = vmul.f32 %v832, %v790
    %v835 = vadd.f32 %v833, 22449.0
    %v836 = vadd.f32 %v834, 22449.0
    %v837 = vmul.f32 %v835, %v789
    %v838 = vmul.f32 %v836, %v790
    %v839 = vadd.f32 %v837, 67284.0
    %v840 = vadd.f32 %v838, 67284.0
    %v841 = vmul.f32 %v839, %v789
    %v842 = vmul.f32 %v840, %v790
    %v843 = vadd.f32 %v841, 118124.0
    %v844 = vadd.f32 %v842, 118124.0
    %v845 = vmul.f32 %v843, %v789
    %v846 = vmul.f32 %v844, %v790
    %v847 = vadd.f32 %v845, 109584.0
    %v848 = vadd.f32 %v846, 109584.0
    %v849 = vmul.f32 %v847, %v789
    %v850 = vmul.f32 %v848, %v790
    %v851 = vadd.f32 %v849, 40320.0
    %v852 = vadd.f32 %v850, 40320.0
    %v853 = vrcp.pop %v851
    %v854 = vrcp.pop %v852
    %v855 = vmul.f32 %v821, %v853
    %v856 = vmul.f32 %v822, %v854
    %v857 = vadd.f32 %v789, 0.5
    %v858 = vadd.f32 %v790, 0.5
    %v859 = vlog2.pop %v791
    %v860 = vmul.f32 %v859, 0.6931472
    %v861 = vlog2.pop %v792
    %v862 = vmul.f32 %v861, 0.6931472
    %v863 = vmul.f32 %v857, %v860
    %v864 = vmul.f32 %v858, %v862
    %v865 = vadd.f32 %v863, 0.9189385
    %v866 = vadd.f32 %v864, 0.9189385
    %v867 = vsub.f32 %v865, %v791
    %v868 = vsub.f32 %v866, %v792
    %v869 = vlog2.pop %v855
    %v870 = vmul.f32 %v869, 0.6931472
    %v871 = vlog2.pop %v856
    %v872 = vmul.f32 %v871, 0.6931472
    %v873 = vadd.f32 %v867, %v870
    %v874 = vadd.f32 %v868, %v872
    %v875 = vrcp.pop %v751
    %v876 = vrcp.pop %v752
    %v877 = vmul.f32 %v783, %v875
    %v878 = vmul.f32 %v784, %v876
    %v879 = vadd.f32 %v873, %v877
    %v880 = vadd.f32 %v874, %v878
    %v881 = vadd.f32 %v879, %v786
    %v882 = vadd.f32 %v880, %v788
    %v883 = vlog2.pop %v751
    %v884 = vmul.f32 %v883, 0.6931472
    %v885 = vlog2.pop %v752
    %v886 = vmul.f32 %v885, 0.6931472
    %v887 = vsub.f32 %v786, %v884
    %v888 = vsub.f32 %v788, %v886
    %v889 = vmul.f32 %v781, %v887
    %v890 = vmul.f32 %v782, %v888
    %v891 = vsub.f32 %v881, %v889
    %v892 = vsub.f32 %v882, %v890
    %v893 = vadd.f32 %v891, %v892
    %v894 = vrot.slane %v893, 4
    %v895 = vadd.f32 %v893, %v894
    %v896 = vrot.slane %v895, 2
    %v897 = vadd.f32 %v895, %v896
    %v898 = vrot.slane %v897, 1
    %v899 = vadd.f32 %v897, %v898
    %v900 = vmul.f32 %v899, 0.0625
    %901 = vst [vmem:[#allocation2] sm:$0x1] %v900
    // Predicated region
    $region34: #{tpu_custom_call.1} parent=1 // pred_check
      _
    $region35: #{tpu_custom_call.1} parent=1 // pred_check_branch
      %903 = sbr.rel (0) target = $region37
    $region36: #{tpu_custom_call.1} parent=1 // pred_region
      %s905 = ssub.s32 16, 16
      %906 = vsyncadd [#allocation3], %s905
      %s908 = sshll.u32 [#allocation2], 4
      %s909 = int_to_ptr.vmem [resolvable:$true] %s908
      %911 = dma.vmem_to_hbm [thread:$0]  %s909, 16, %s8, [#allocation3]
    $region37: #{tpu_custom_call.1} parent=1 // pred_fallthru
      _
    // Predicated region
    $region38: #{tpu_custom_call.1} parent=1 // pred_check
      _
    $region39: #{tpu_custom_call.1} parent=1 // pred_check_branch
      %913 = sbr.rel (0) target = $region41
    $region40: #{tpu_custom_call.1} parent=1 // pred_region
      %914 = dma.done [#allocation3], 16
    $region41: #{tpu_custom_call.1} parent=1 // pred_fallthru
      _
    %915 = vsyncpa [#allocation3], 1

</llo_original>
